<compile_context>
chip_gen: v6e
topology: v6e:2x2x1
jax: 0.10.0
libtpu: 0.0.40
codegen_flags: <defaults>
</compile_context>

<pallas_src>
import functools

import jax
import jax.numpy as jnp
from jax.experimental import pallas as pl
from jax.experimental.pallas import tpu as pltpu

LANES = 128


def _round_up(x, m):
    return (x + m - 1) // m * m


def _partial_sums_kernel(o_ref, e_ref, s1_ref, s2_ref, *, tile_rows, valid_rows,
                         need_row_mask):
    # o_ref / e_ref: (b_tile, tile_rows, 128) block of the lane-dense inputs.
    d = e_ref[...].astype(jnp.float32) - o_ref[...].astype(jnp.float32)
    if need_row_mask:
        # The last row-chunk is a partial boundary block: its out-of-bounds
        # rows contain unspecified data, so zero them before BOTH sums
        # (zeros are exact for sum and sum-of-squares).  VPU cmp+select is
        # free in this HBM-bandwidth-bound kernel.
        j = pl.program_id(1)
        row = jax.lax.broadcasted_iota(jnp.int32, d.shape, dimension=1)
        d = jnp.where(j * tile_rows + row < valid_rows, d, 0.0)
    # Reduce only the row (sublane) axis; keep outputs lane-dense (b_tile, 128).
    s1_ref[0, :, :] = jnp.sum(d, axis=1)
    s2_ref[0, :, :] = jnp.sum(d * d, axis=1)


def t_global(o, e, *, vmem_budget_bytes=24 * 1024 * 1024):
    """mean over batch of unbiased var(e - o) over all non-batch dims."""
    assert o.shape == e.shape, (o.shape, e.shape)
    b = int(o.shape[0])
    n = 1
    for dim in o.shape[1:]:
        n *= int(dim)

    # Clamp the budget so the double-buffered input set stays safe on every
    # generation (v7x VMEM is only 64 MiB physical).
    budget = min(int(vmem_budget_bytes), 48 * 1024 * 1024)

    itemsize = jnp.dtype(o.dtype).itemsize
    # Sublane packing: f32 -> 8, bf16/f16 -> 16, int8/fp8 -> 32 rows per vreg.
    sublane = {4: 8, 2: 16, 1: 32}.get(itemsize, 8)

    r0 = pl.cdiv(n, LANES)          # valid rows per sample in the (B, R, 128) view
    n_ceil = r0 * LANES

    o2 = o.reshape(b, n)
    e2 = e.reshape(b, n)
    if n_ceil > n:
        # Only when n % 128 != 0: pad < 128 elements per sample so the
        # lane-dense reshape below is possible (zeros are exact for the sums).
        o2 = jnp.pad(o2, ((0, 0), (0, n_ceil - n)))
        e2 = jnp.pad(e2, ((0, 0), (0, n_ceil - n)))
    # Splitting the minor dim by 128 keeps the row-major layout -> no copy
    # when no pad was needed.
    o3 = o2.reshape(b, r0, LANES)
    e3 = e2.reshape(b, r0, LANES)

    # ---- batch tiling (only kicks in for very large B) --------------------
    # Minimum block bytes per batch element: 2 inputs x double buffer x
    # (sublane rows x 128 lanes) in the input dtype.
    per_b_min = 4 * sublane * LANES * itemsize
    b_tile = b
    if b * per_b_min > budget:
        for cand in range(b - 1, 0, -1):
            if b % cand == 0 and cand % 8 == 0 and cand * per_b_min <= budget:
                b_tile = cand
                break
    num_b = b // b_tile

    # ---- balanced row tiling ----------------------------------------------
    bytes_per_row = b_tile * LANES * itemsize
    max_rows = max(sublane,
                   (budget // (4 * bytes_per_row)) // sublane * sublane)
    # Enough steps for DMA/compute overlap and two-TC occupancy on v7x, but
    # never shrink a tile below one sublane group.
    min_steps = min(8, pl.cdiv(r0, sublane))
    num_steps = max(pl.cdiv(r0, max_rows), min_steps, 1)
    tile_rows = _round_up(pl.cdiv(r0, num_steps), sublane)
    num_steps = pl.cdiv(r0, tile_rows)
    r_pad = num_steps * tile_rows
    need_row_mask = r_pad > r0      # partial boundary block -> mask in-kernel

    in_spec = pl.BlockSpec((b_tile, tile_rows, LANES), lambda bi, j: (bi, j, 0))
    out_spec = pl.BlockSpec((1, b_tile, LANES), lambda bi, j: (j, bi, 0))

    # vmem_limit tied to the actual live set (+ margin for compiler scratch).
    live_bytes = (4 * b_tile * tile_rows * LANES * itemsize       # 2 in x 2 buf
                  + 4 * b_tile * LANES * 4)                       # 2 out x 2 buf
    vmem_limit = min(max(live_bytes + (2 << 20), 4 << 20), 64 << 20)

    cost = pl.CostEstimate(
        flops=4 * b * n_ceil,
        transcendentals=0,
        bytes_accessed=2 * b * n_ceil * itemsize
        + 2 * num_steps * b * LANES * 4,
    )

    kernel = functools.partial(
        _partial_sums_kernel,
        tile_rows=tile_rows,
        valid_rows=r0,
        need_row_mask=need_row_mask,
    )

    ps1, ps2 = pl.pallas_call(
        kernel,
        grid=(num_b, num_steps),
        in_specs=[in_spec, in_spec],
        out_specs=(out_spec, out_spec),
        out_shape=(
            jax.ShapeDtypeStruct((num_steps, b, LANES), jnp.float32),
            jax.ShapeDtypeStruct((num_steps, b, LANES), jnp.float32),
        ),
        compiler_params=pltpu.CompilerParams(
            dimension_semantics=("parallel", "parallel"),
            vmem_limit_bytes=vmem_limit,
        ),
        cost_estimate=cost,
    )(o3, e3)

    # Tiny final combine in the wrapper (per-sample variance + batch mean).
    s1 = jnp.sum(ps1, axis=(0, 2))      # (B,)  sum of (e - o)
    s2 = jnp.sum(ps2, axis=(0, 2))      # (B,)  sum of (e - o)^2
    n_f = jnp.float32(n)
    var = (s2 - s1 * s1 / n_f) / (n_f - 1.0)   # unbiased, matches torch.var
    return jnp.mean(var)


def t_global_ref(o, e):
    """Pure-JAX reference mirroring the PyTorch module."""
    d = (e - o).astype(jnp.float32)
    dis = jnp.var(d.reshape(d.shape[0], -1), axis=1, ddof=1)
    return jnp.mean(dis)


if __name__ == "__main__":
    key = jax.random.PRNGKey(0)
    k1, k2 = jax.random.split(key)
    o = jax.random.normal(k1, (2, 4, 16, 16), dtype=jnp.float32)
    e = jax.random.normal(k2, (2, 4, 16, 16), dtype=jnp.float32)

    out = t_global(o, e)
    out = jax.block_until_ready(out)

    ref = t_global_ref(o, e)
    assert jnp.allclose(out, ref, rtol=1e-4, atol=1e-5), (out, ref)
    print("KERNEL_OK")
</pallas_src>

<mosaic_0001>
module attributes {stable_mosaic.version = 11 : i64} {
  func.func @_partial_sums_kernel(%arg0: i32, %arg1: i32, %arg2: memref<2x8x128xf32, #tpu.memory_space<vmem>>, %arg3: memref<2x8x128xf32, #tpu.memory_space<vmem>>, %arg4: memref<1x2x128xf32, #tpu.memory_space<vmem>>, %arg5: memref<1x2x128xf32, #tpu.memory_space<vmem>>) attributes {dimension_semantics = [#tpu.dimension_semantics<parallel>, #tpu.dimension_semantics<parallel>], iteration_bounds = array<i64: 1, 1>, scalar_prefetch = 0 : i64, scratch_operands = 0 : i64, tpu.core_type = #tpu.core_type<tc>, window_params = [{transform_indices = @transform_0, window_bounds = array<i64: 2, 8, 128>}, {transform_indices = @transform_1, window_bounds = array<i64: 2, 8, 128>}, {transform_indices = @transform_2, window_bounds = array<i64: 1, 2, 128>}, {transform_indices = @transform_3, window_bounds = array<i64: 1, 2, 128>}]} {
    %c0 = arith.constant 0 : index
    %c0_0 = arith.constant 0 : index
    %c0_1 = arith.constant 0 : index
    %0 = vector.load %arg3[%c0, %c0_0, %c0_1] : memref<2x8x128xf32, #tpu.memory_space<vmem>>, vector<2x8x128xf32>
    %c0_2 = arith.constant 0 : index
    %c0_3 = arith.constant 0 : index
    %c0_4 = arith.constant 0 : index
    %1 = vector.load %arg2[%c0_2, %c0_3, %c0_4] : memref<2x8x128xf32, #tpu.memory_space<vmem>>, vector<2x8x128xf32>
    %2 = arith.subf %0, %1 : vector<2x8x128xf32>
    %cst = arith.constant dense<0.000000e+00> : vector<2x128xf32>
    %3 = vector.multi_reduction <add>, %2, %cst [1] : vector<2x8x128xf32> to vector<2x128xf32>
    %c0_5 = arith.constant 0 : index
    %c0_6 = arith.constant 0 : index
    %c0_7 = arith.constant 0 : index
    %4 = vector.load %arg4[%c0_5, %c0_6, %c0_7] : memref<1x2x128xf32, #tpu.memory_space<vmem>>, vector<1x2x128xf32>
    %5 = vector.shape_cast %4 : vector<1x2x128xf32> to vector<2x128xf32>
    %6 = vector.shape_cast %3 : vector<2x128xf32> to vector<1x2x128xf32>
    tpu.vector_store %arg4[%c0_5, %c0_6, %c0_7], %6 {strides = array<i32>} : memref<1x2x128xf32, #tpu.memory_space<vmem>>, vector<1x2x128xf32>,
    %7 = arith.mulf %2, %2 : vector<2x8x128xf32>
    %cst_8 = arith.constant dense<0.000000e+00> : vector<2x128xf32>
    %8 = vector.multi_reduction <add>, %7, %cst_8 [1] : vector<2x8x128xf32> to vector<2x128xf32>
    %c0_9 = arith.constant 0 : index
    %c0_10 = arith.constant 0 : index
    %c0_11 = arith.constant 0 : index
    %9 = vector.load %arg5[%c0_9, %c0_10, %c0_11] : memref<1x2x128xf32, #tpu.memory_space<vmem>>, vector<1x2x128xf32>
    %10 = vector.shape_cast %9 : vector<1x2x128xf32> to vector<2x128xf32>
    %11 = vector.shape_cast %8 : vector<2x128xf32> to vector<1x2x128xf32>
    tpu.vector_store %arg5[%c0_9, %c0_10, %c0_11], %11 {strides = array<i32>} : memref<1x2x128xf32, #tpu.memory_space<vmem>>, vector<1x2x128xf32>,
    return
  }
  func.func @transform_0(%arg0: i32, %arg1: i32) -> (i32, i32, i32) {
    %c0_i32 = arith.constant 0 : i32
    %c0_i32_0 = arith.constant 0 : i32
    return %arg0, %arg1, %c0_i32 : i32, i32, i32
  }
  func.func @transform_1(%arg0: i32, %arg1: i32) -> (i32, i32, i32) {
    %c0_i32 = arith.constant 0 : i32
    %c0_i32_0 = arith.constant 0 : i32
    return %arg0, %arg1, %c0_i32 : i32, i32, i32
  }
  func.func @transform_2(%arg0: i32, %arg1: i32) -> (i32, i32, i32) {
    %c0_i32 = arith.constant 0 : i32
    %c0_i32_0 = arith.constant 0 : i32
    return %arg1, %arg0, %c0_i32 : i32, i32, i32
  }
  func.func @transform_3(%arg0: i32, %arg1: i32) -> (i32, i32, i32) {
    %c0_i32 = arith.constant 0 : i32
    %c0_i32_0 = arith.constant 0 : i32
    return %arg1, %arg0, %c0_i32 : i32, i32, i32
  }
}

</mosaic_0001>

<llo_original>
// kernel: tpu_custom_call.1
$region0: #{tpu_custom_call.1}
  #allocation0 [shape = 'u32[]', space=smem, size = 0x4, offset = 0x4, fixed_abs, tag = 'smem constant byte address 0x4 - core index']
  #allocation1 [shape = 'u32[144,128]{1,0:T(1,128)}', space=vmem, size = 0x12000, scoped, tag = 'internal scratch']
  %s0 = inlined_call_operand.hbm [shape: f32[2,8,128], index: 0, kind: input, shape index: {}]
  %s1 = inlined_call_operand.hbm [shape: f32[2,8,128], index: 1, kind: input, shape index: {}]
  %s2 = inlined_call_operand.hbm [shape: f32[1,2,128], index: 2, kind: output, shape index: {0}]
  %s3 = inlined_call_operand.hbm [shape: f32[1,2,128], index: 3, kind: output, shape index: {1}]
  %4 = xla_tuple %s2, %s3
  %s5 = sld [smem:[#allocation0]]
  $region34: #{tpu_custom_call.1} parent=0
    _
  %s7 = ssub.s32 1, %s5
  %s8 = scalar_select 0, %s7, %s5
  $region1: #{tpu_custom_call.1} parent=0
    #allocation2 [shape = 'u8[8192]{0}', space=vmem, size = 0x2000, scoped, tag = 'input window, operand 0, single buffered']
    #allocation3 [shape = 's32[1]{0}', space=sflag, size = 0x4, scoped, tag = 'scoped memory for tpu_custom_call.1']
    #allocation4 [shape = 's32[1]{0}', space=sflag, size = 0x4, scoped, tag = 'scoped memory for tpu_custom_call.1']
    #allocation5 [shape = 'u8[8192]{0}', space=vmem, size = 0x2000, scoped, tag = 'input window, operand 1, single buffered']
    #allocation6 [shape = 's32[1]{0}', space=sflag, size = 0x4, scoped, tag = 'scoped memory for tpu_custom_call.1']
    #allocation7 [shape = 'u8[1024]{0}', space=vmem, size = 0x400, scoped, tag = 'output window, operand 0, single buffered']
    #allocation8 [shape = 'u8[1024]{0}', space=vmem, size = 0x400, scoped, tag = 'output window, operand 1, single buffered']
    #allocation9 [shape = 's32[1]{0}', space=sflag, size = 0x4, scoped, tag = 'scoped memory for tpu_custom_call.1']
    %9 = vsyncpa [#allocation3], 0
    %10 = vsyncpa [#allocation6], 0
    %11 = vsyncpa [#allocation4], 0
    %12 = vsyncpa [#allocation9], 0
    // Predicated region
    $region2: #{tpu_custom_call.1} parent=1 // pred_check
      _
    $region3: #{tpu_custom_call.1} parent=1 // pred_check_branch
      %14 = sbr.rel (0) target = $region5
    $region4: #{tpu_custom_call.1} parent=1 // pred_region
      %s16 = ssub.s32 256, 256
      %17 = vsyncadd [#allocation3], %s16
      %s18 = sshll.u32 [#allocation2], 4
      %s19 = int_to_ptr.vmem [resolvable:$true] %s18
      %24 = dma.hbm_to_vmem [thread:$0]  %s0, 256, %s19, [#allocation3], 128, 128, 8
    $region5: #{tpu_custom_call.1} parent=1 // pred_fallthru
      _
    // Predicated region
    $region6: #{tpu_custom_call.1} parent=1 // pred_check
      _
    $region7: #{tpu_custom_call.1} parent=1 // pred_check_branch
      %26 = sbr.rel (0) target = $region9
    $region8: #{tpu_custom_call.1} parent=1 // pred_region
      %s28 = ssub.s32 256, 256
      %29 = vsyncadd [#allocation6], %s28
      %s30 = sshll.u32 [#allocation5], 4
      %s31 = int_to_ptr.vmem [resolvable:$true] %s30
      %36 = dma.hbm_to_vmem [thread:$0]  %s1, 256, %s31, [#allocation6], 128, 128, 8
    $region9: #{tpu_custom_call.1} parent=1 // pred_fallthru
      _
    // Predicated region
    $region10: #{tpu_custom_call.1} parent=1 // pred_check
      _
    $region11: #{tpu_custom_call.1} parent=1 // pred_check_branch
      %38 = sbr.rel (0) target = $region13
    $region12: #{tpu_custom_call.1} parent=1 // pred_region
      %39 = dma.done [#allocation3], 256
    $region13: #{tpu_custom_call.1} parent=1 // pred_fallthru
      _
    // Predicated region
    $region14: #{tpu_custom_call.1} parent=1 // pred_check
      _
    $region15: #{tpu_custom_call.1} parent=1 // pred_check_branch
      %41 = sbr.rel (0) target = $region17
    $region16: #{tpu_custom_call.1} parent=1 // pred_region
      %42 = dma.done [#allocation6], 256
    $region17: #{tpu_custom_call.1} parent=1 // pred_fallthru
      _
    %v43 = vld [vmem:[#allocation5] sm:$0xff]
    %v44 = vld [vmem:[#allocation5 + $0x8] sm:$0xff]
    %v45 = vld [vmem:[#allocation2] sm:$0xff]
    %v46 = vld [vmem:[#allocation2 + $0x8] sm:$0xff]
    %v47 = vsub.f32 %v43, %v45
    %v48 = vsub.f32 %v44, %v46
    %v49 = vrot.slane %v47, 4
    %v50 = vadd.f32 %v47, %v49
    %v51 = vrot.slane %v50, 2
    %v52 = vadd.f32 %v50, %v51
    %v53 = vrot.slane %v52, 1
    %v54 = vadd.f32 %v52, %v53
    %v55 = vrot.slane %v48, 4
    %v56 = vadd.f32 %v48, %v55
    %v57 = vrot.slane %v56, 2
    %v58 = vadd.f32 %v56, %v57
    %v59 = vrot.slane %v58, 1
    %v60 = vadd.f32 %v58, %v59
    %vm63 = vcmask 1041409
    %v64 = vsel %vm63, %v60, %v54
    %66 = vst [vmem:[#allocation7] sm:$0x3] %v64
    %v67 = vmul.f32 %v47, %v47
    %v68 = vmul.f32 %v48, %v48
    %v69 = vrot.slane %v67, 4
    %v70 = vadd.f32 %v67, %v69
    %v71 = vrot.slane %v70, 2
    %v72 = vadd.f32 %v70, %v71
    %v73 = vrot.slane %v72, 1
    %v74 = vadd.f32 %v72, %v73
    %v75 = vrot.slane %v68, 4
    %v76 = vadd.f32 %v68, %v75
    %v77 = vrot.slane %v76, 2
    %v78 = vadd.f32 %v76, %v77
    %v79 = vrot.slane %v78, 1
    %v80 = vadd.f32 %v78, %v79
    %v83 = vsel %vm63, %v80, %v74
    %85 = vst [vmem:[#allocation8] sm:$0x3] %v83
    // Predicated region
    $region18: #{tpu_custom_call.1} parent=1 // pred_check
      _
    $region19: #{tpu_custom_call.1} parent=1 // pred_check_branch
      %87 = sbr.rel (0) target = $region21
    $region20: #{tpu_custom_call.1} parent=1 // pred_region
      %s89 = ssub.s32 32, 32
      %90 = vsyncadd [#allocation4], %s89
      %s92 = sshll.u32 [#allocation7], 4
      %s93 = int_to_ptr.vmem [resolvable:$true] %s92
      %95 = dma.vmem_to_hbm [thread:$0]  %s93, 32, %s2, [#allocation4]
    $region21: #{tpu_custom_call.1} parent=1 // pred_fallthru
      _
    // Predicated region
    $region22: #{tpu_custom_call.1} parent=1 // pred_check
      _
    $region23: #{tpu_custom_call.1} parent=1 // pred_check_branch
      %97 = sbr.rel (0) target = $region25
    $region24: #{tpu_custom_call.1} parent=1 // pred_region
      %s99 = ssub.s32 32, 32
      %100 = vsyncadd [#allocation9], %s99
      %s102 = sshll.u32 [#allocation8], 4
      %s103 = int_to_ptr.vmem [resolvable:$true] %s102
      %105 = dma.vmem_to_hbm [thread:$0]  %s103, 32, %s3, [#allocation9]
    $region25: #{tpu_custom_call.1} parent=1 // pred_fallthru
      _
    // Predicated region
    $region26: #{tpu_custom_call.1} parent=1 // pred_check
      _
    $region27: #{tpu_custom_call.1} parent=1 // pred_check_branch
      %107 = sbr.rel (0) target = $region29
    $region28: #{tpu_custom_call.1} parent=1 // pred_region
      %108 = dma.done [#allocation4], 32
    $region29: #{tpu_custom_call.1} parent=1 // pred_fallthru
      _
    // Predicated region
    $region30: #{tpu_custom_call.1} parent=1 // pred_check
      _
    $region31: #{tpu_custom_call.1} parent=1 // pred_check_branch
      %110 = sbr.rel (0) target = $region33
    $region32: #{tpu_custom_call.1} parent=1 // pred_region
      %111 = dma.done [#allocation9], 32
    $region33: #{tpu_custom_call.1} parent=1 // pred_fallthru
      _
    %112 = vsyncpa [#allocation3], 1
    %113 = vsyncpa [#allocation6], 1
    %114 = vsyncpa [#allocation4], 1
    %115 = vsyncpa [#allocation9], 1

</llo_original>
